<compile_context>
chip_gen: v6e
topology: v6e:2x2x1
jax: 0.10.0
libtpu: 0.0.40
codegen_flags: <defaults>
</compile_context>

<pallas_src>
import jax
import jax.numpy as jnp
from jax.experimental import pallas as pl
from jax.experimental.pallas import tpu as pltpu

IMAGE_RGB_MEAN = (0.5, 0.5, 0.5)
IMAGE_RGB_STD = (0.5, 0.5, 0.5)
FEAT_DIM = 1024      # next_vit_base final feature width (matches nn.Linear(1024, 1))
TK_MAX = 4096        # K-tile: 2 * 4096 * 1024 * 2B = 16 MiB double-buffered bf16 weights


def _round_up(x, m):
    return (x + m - 1) // m * m


def _tile_k(k):
    """K tile size: multiple of 128, capped at TK_MAX."""
    return min(TK_MAX, _round_up(k, 128))


def _net_kernel(x_ref, we_ref, be_ref, wc_ref, bc_ref, y_ref,
                prob_ref, loss_ref, acc_ref):
    """K-tiled encoder-surrogate GEMM + fused head/loss in the finalize step.

    x_ref:   (B, tk)      raw single-channel pixels for this K tile (f32)
    we_ref:  (tk, 1024)   folded encoder weight tile (bf16)
    be_ref:  (1, 1024)    encoder bias (f32)
    wc_ref:  (1, 1024)    cancer-head weight row (f32)
    bc_ref:  (1, 1)       cancer-head bias (f32)
    y_ref:   (B, 1)       labels (f32)
    acc_ref: (B, 1024)    f32 accumulator (VMEM scratch, persists across K tiles)
    """
    k = pl.program_id(0)

    @pl.when(k == 0)
    def _():
        acc_ref[...] = jnp.zeros_like(acc_ref)

    # RGB normalize folded in: (x - 0.5) / 0.5 == 2*x - 1 (exact FMA, no div).
    xn = (x_ref[...] * 2.0 - 1.0).astype(we_ref.dtype)            # (B, tk) bf16
    acc_ref[...] += jnp.dot(xn, we_ref[...],
                            preferred_element_type=jnp.float32)

    @pl.when(k == pl.num_programs(0) - 1)
    def _():
        feat = acc_ref[...] + be_ref[...]                          # (B, 1024) f32
        # cancer = nn.Linear(1024, 1): N=1 head done as a lane reduction
        # (VPU/XLU) instead of an MXU matmul with a wasted result column.
        logits = jnp.sum(feat * wc_ref[...], axis=-1, keepdims=True)
        logits = logits + bc_ref[0, 0]                             # (B, 1)
        y = y_ref[...]                                             # (B, 1)
        # F.binary_cross_entropy_with_logits, mean reduction (stable form).
        per = (jnp.maximum(logits, 0.0) - logits * y
               + jnp.log1p(jnp.exp(-jnp.abs(logits))))
        loss_ref[...] = jnp.mean(per, keepdims=True)               # (1, 1)
        # torch.sigmoid + torch.nan_to_num
        prob_ref[...] = jnp.nan_to_num(jax.nn.sigmoid(logits))     # (B, 1)


def init_params(key, h, w):
    """Surrogate-encoder (3*H*W -> 1024 linear) + cancer-head parameters.

    * The 3-channel encoder weight is folded to a single-channel weight
      (mean == std == 0.5 makes the normalized channels identical).
    * The folded weight is zero-padded to a multiple of the K tile ONCE here,
      so the forward path never copies the large weight array.
    * Streamed weight is bf16; biases/head stay f32.
    """
    hw = h * w
    k1, k2, k3 = jax.random.split(key, 3)
    we_full = jax.random.normal(k1, (3 * hw, FEAT_DIM), jnp.float32) * 0.02
    we_eff = we_full[:hw] + we_full[hw:2 * hw] + we_full[2 * hw:]  # (HW, 1024)

    tk = _tile_k(hw)
    k_pad = _round_up(hw, tk)
    if k_pad != hw:
        # Exact: padded weight rows are zero, so whatever the padded x values
        # become after the 2*x-1 normalize, their contribution is 0.
        we_eff = jnp.pad(we_eff, ((0, k_pad - hw), (0, 0)))

    be = jax.random.normal(k2, (1, FEAT_DIM), jnp.float32) * 0.02
    wc = jax.random.normal(k3, (1, FEAT_DIM), jnp.float32) * 0.02
    bc = jnp.zeros((1, 1), jnp.float32)
    return {
        "we_eff": we_eff.astype(jnp.bfloat16),  # dominant HBM stream: bf16
        "be": be,
        "wc": wc,                               # row layout for VPU reduction
        "bc": bc,
    }


def net_forward(params, image, cancer):
    """image: (B, 1, H, W) float32 (NCHW, like PyTorch); cancer: (B,) labels."""
    B, C, H, W = image.shape
    assert C == 1, "single-channel input, expanded to RGB like x.expand(-1,3,-1,-1)"
    K = H * W

    we = params["we_eff"]                        # (k_pad, 1024) bf16, pre-padded
    k_pad = we.shape[0]
    tk = _tile_k(K)                              # same static formula as init_params
    assert k_pad == _round_up(K, tk) and k_pad % tk == 0
    k_tiles = k_pad // tk

    x_flat = image.reshape(B, K)                 # free view, lane-dense
    if k_pad != K:
        # Only the tiny x slab is padded per call (weight was padded once).
        x_flat = jnp.pad(x_flat, ((0, 0), (0, k_pad - K)))
    y = cancer.reshape(B, 1).astype(jnp.float32)

    cost = pl.CostEstimate(
        flops=2 * B * k_pad * FEAT_DIM,
        transcendentals=4 * B,
        bytes_accessed=int(we.size * we.dtype.itemsize
                           + x_flat.size * x_flat.dtype.itemsize
                           + (2 * FEAT_DIM + 3 * B + 2) * 4),
    )

    probs, loss = pl.pallas_call(
        _net_kernel,
        out_shape=(
            jax.ShapeDtypeStruct((B, 1), jnp.float32),
            jax.ShapeDtypeStruct((1, 1), jnp.float32),
        ),
        grid_spec=pltpu.PrefetchScalarGridSpec(
            num_scalar_prefetch=0,
            grid=(k_tiles,),
            in_specs=[
                pl.BlockSpec((B, tk), lambda k: (0, k)),          # x tile
                pl.BlockSpec((tk, FEAT_DIM), lambda k: (k, 0)),   # weight tile
                pl.BlockSpec((1, FEAT_DIM), lambda k: (0, 0)),    # be
                pl.BlockSpec((1, FEAT_DIM), lambda k: (0, 0)),    # wc row
                pl.BlockSpec((1, 1), lambda k: (0, 0)),           # bc
                pl.BlockSpec((B, 1), lambda k: (0, 0)),           # labels
            ],
            out_specs=(
                pl.BlockSpec((B, 1), lambda k: (0, 0)),           # probs
                pl.BlockSpec((1, 1), lambda k: (0, 0)),           # loss
            ),
            scratch_shapes=[pltpu.VMEM((B, FEAT_DIM), jnp.float32)],
        ),
        compiler_params=pltpu.CompilerParams(
            dimension_semantics=("arbitrary",),   # K is a reduction axis
            vmem_limit_bytes=40 * 1024 * 1024,    # room for 2x 8 MiB weight tiles
        ),
        cost_estimate=cost,
    )(x_flat, we, params["be"], params["wc"], params["bc"], y)

    return {"bce_loss": loss[0, 0], "cancer": probs.reshape(-1)}


if __name__ == "__main__":
    key = jax.random.PRNGKey(0)
    k_img, k_par = jax.random.split(key)

    B, H, W = 2, 16, 16
    image = jax.random.uniform(k_img, (B, 1, H, W), dtype=jnp.float32)
    labels = jnp.array([0.0, 1.0], dtype=jnp.float32)

    params = init_params(k_par, H, W)

    out = jax.jit(net_forward)(params, image, labels)
    jax.block_until_ready(out)

    assert out["cancer"].shape == (B,)
    assert out["bce_loss"].shape == ()
    assert bool(jnp.all(jnp.isfinite(out["cancer"])))
    assert bool(jnp.isfinite(out["bce_loss"]))

    # Pure-JAX reference check (same bf16 weights, f32 accumulation).
    xn_ref = (image.reshape(B, -1) * 2.0 - 1.0).astype(jnp.bfloat16)
    feat_ref = jnp.dot(xn_ref, params["we_eff"][: H * W],
                       preferred_element_type=jnp.float32) + params["be"]
    logit_ref = jnp.sum(feat_ref * params["wc"], axis=-1) + params["bc"][0, 0]
    prob_ref = jax.nn.sigmoid(logit_ref)
    loss_ref = jnp.mean(jnp.maximum(logit_ref, 0.0) - logit_ref * labels
                        + jnp.log1p(jnp.exp(-jnp.abs(logit_ref))))
    assert bool(jnp.allclose(out["cancer"], prob_ref, atol=1e-2, rtol=1e-2))
    assert bool(jnp.allclose(out["bce_loss"], loss_ref, atol=1e-2, rtol=1e-2))

    print("KERNEL_OK")
</pallas_src>

<mosaic_0001>
module attributes {stable_mosaic.version = 11 : i64} {
  func.func @_net_kernel(%arg0: i32, %arg1: memref<2x256xf32, #tpu.memory_space<vmem>>, %arg2: memref<256x1024xbf16, #tpu.memory_space<vmem>>, %arg3: memref<1x1024xf32, #tpu.memory_space<vmem>>, %arg4: memref<1x1024xf32, #tpu.memory_space<vmem>>, %arg5: memref<1x1xf32, #tpu.memory_space<vmem>>, %arg6: memref<2x1xf32, #tpu.memory_space<vmem>>, %arg7: memref<2x1xf32, #tpu.memory_space<vmem>>, %arg8: memref<1x1xf32, #tpu.memory_space<vmem>>, %arg9: memref<2x1024xf32, #tpu.memory_space<vmem>>) attributes {dimension_semantics = [#tpu.dimension_semantics<arbitrary>], iteration_bounds = array<i64: 1>, scalar_prefetch = 0 : i64, scratch_operands = 1 : i64, tpu.core_type = #tpu.core_type<tc>, window_params = [{transform_indices = @transform_0, window_bounds = array<i64: 2, 256>}, {transform_indices = @transform_1, window_bounds = array<i64: 256, 1024>}, {pipeline_mode = #tpu.pipeline_mode<synchronous>, transform_indices = @transform_2, window_bounds = array<i64: 1, 1024>}, {pipeline_mode = #tpu.pipeline_mode<synchronous>, transform_indices = @transform_3, window_bounds = array<i64: 1, 1024>}, {pipeline_mode = #tpu.pipeline_mode<synchronous>, transform_indices = @transform_4, window_bounds = array<i64: 1, 1>}, {pipeline_mode = #tpu.pipeline_mode<synchronous>, transform_indices = @transform_5, window_bounds = array<i64: 2, 1>}, {pipeline_mode = #tpu.pipeline_mode<synchronous>, transform_indices = @transform_6, window_bounds = array<i64: 2, 1>}, {pipeline_mode = #tpu.pipeline_mode<synchronous>, transform_indices = @transform_7, window_bounds = array<i64: 1, 1>}]} {
    %c0_i32 = arith.constant 0 : i32
    %0 = arith.cmpi eq, %arg0, %c0_i32 : i32
    %1 = arith.extui %0 : i1 to i32
    %c0_i32_0 = arith.constant 0 : i32
    %2 = arith.cmpi ne, %1, %c0_i32_0 : i32
    scf.if %2 {
      %cst_12 = arith.constant 0.000000e+00 : f32
      %17 = vector.broadcast %cst_12 : f32 to vector<2x1024xf32>
      %c0_13 = arith.constant 0 : index
      %c0_14 = arith.constant 0 : index
      %18 = vector.load %arg9[%c0_13, %c0_14] : memref<2x1024xf32, #tpu.memory_space<vmem>>, vector<2x1024xf32>
      tpu.vector_store %arg9[%c0_13, %c0_14], %17 {strides = array<i32>} : memref<2x1024xf32, #tpu.memory_space<vmem>>, vector<2x1024xf32>,
    } else {
    }
    %c0 = arith.constant 0 : index
    %c0_1 = arith.constant 0 : index
    %3 = vector.load %arg1[%c0, %c0_1] : memref<2x256xf32, #tpu.memory_space<vmem>>, vector<2x256xf32>
    %cst = arith.constant 2.000000e+00 : f32
    %4 = vector.broadcast %cst : f32 to vector<2x256xf32>
    %5 = arith.mulf %3, %4 : vector<2x256xf32>
    %cst_2 = arith.constant 1.000000e+00 : f32
    %6 = vector.broadcast %cst_2 : f32 to vector<2x256xf32>
    %7 = arith.subf %5, %6 : vector<2x256xf32>
    %8 = arith.truncf %7 : vector<2x256xf32> to vector<2x256xbf16>
    %c0_3 = arith.constant 0 : index
    %c0_4 = arith.constant 0 : index
    %9 = vector.load %arg9[%c0_3, %c0_4] : memref<2x1024xf32, #tpu.memory_space<vmem>>, vector<2x1024xf32>
    %c0_5 = arith.constant 0 : index
    %c0_6 = arith.constant 0 : index
    %10 = vector.load %arg2[%c0_5, %c0_6] : memref<256x1024xbf16, #tpu.memory_space<vmem>>, vector<256x1024xbf16>
    %cst_7 = arith.constant dense<0.000000e+00> : vector<2x1024xf32>
    %11 = tpu.matmul %8, %10, %cst_7 {dimension_numbers = #tpu.dot_dimension_numbers<[1], [0], [0], [1], [0, 0, 1, 1], [], []>} : vector<2x256xbf16>, vector<256x1024xbf16>, vector<2x1024xf32> -> vector<2x1024xf32>
    %12 = arith.addf %9, %11 : vector<2x1024xf32>
    %c0_8 = arith.constant 0 : index
    %c0_9 = arith.constant 0 : index
    %13 = vector.load %arg9[%c0_8, %c0_9] : memref<2x1024xf32, #tpu.memory_space<vmem>>, vector<2x1024xf32>
    tpu.vector_store %arg9[%c0_8, %c0_9], %12 {strides = array<i32>} : memref<2x1024xf32, #tpu.memory_space<vmem>>, vector<2x1024xf32>,
    %c0_i32_10 = arith.constant 0 : i32
    %14 = arith.cmpi eq, %arg0, %c0_i32_10 : i32
    %15 = arith.extui %14 : i1 to i32
    %c0_i32_11 = arith.constant 0 : i32
    %16 = arith.cmpi ne, %15, %c0_i32_11 : i32
    scf.if %16 {
      %c0_12 = arith.constant 0 : index
      %c0_13 = arith.constant 0 : index
      %17 = vector.load %arg9[%c0_12, %c0_13] : memref<2x1024xf32, #tpu.memory_space<vmem>>, vector<2x1024xf32>
      %c0_14 = arith.constant 0 : index
      %c0_15 = arith.constant 0 : index
      %18 = vector.load %arg3[%c0_14, %c0_15] : memref<1x1024xf32, #tpu.memory_space<vmem>>, vector<1x1024xf32>
      %19 = vector.broadcast %18 : vector<1x1024xf32> to vector<2x1024xf32>
      %20 = arith.addf %17, %19 : vector<2x1024xf32>
      %c0_16 = arith.constant 0 : index
      %c0_17 = arith.constant 0 : index
      %21 = vector.load %arg4[%c0_16, %c0_17] : memref<1x1024xf32, #tpu.memory_space<vmem>>, vector<1x1024xf32>
      %22 = vector.broadcast %21 : vector<1x1024xf32> to vector<2x1024xf32>
      %23 = arith.mulf %20, %22 : vector<2x1024xf32>
      %cst_18 = arith.constant dense<0.000000e+00> : vector<2xf32>
      %24 = vector.multi_reduction <add>, %23, %cst_18 [1] : vector<2x1024xf32> to vector<2xf32>
      %25 = vector.shape_cast %24 : vector<2xf32> to vector<2x1xf32>
      %c0_19 = arith.constant 0 : index
      %c0_20 = arith.constant 0 : index
      %26 = vector.load %arg5[%c0_19, %c0_20] : memref<1x1xf32, #tpu.memory_space<vmem>>, vector<1x1xf32>
      %27 = vector.extract %26[0, 0] : f32 from vector<1x1xf32>
      %28 = vector.broadcast %27 : f32 to vector<2x1xf32>
      %29 = arith.addf %25, %28 : vector<2x1xf32>
      %c0_21 = arith.constant 0 : index
      %c0_22 = arith.constant 0 : index
      %30 = vector.load %arg6[%c0_21, %c0_22] : memref<2x1xf32, #tpu.memory_space<vmem>>, vector<2x1xf32>
      %cst_23 = arith.constant 0.000000e+00 : f32
      %31 = vector.broadcast %cst_23 : f32 to vector<2x1xf32>
      %32 = arith.maximumf %29, %31 : vector<2x1xf32>
      %33 = arith.mulf %29, %30 : vector<2x1xf32>
      %34 = arith.subf %32, %33 : vector<2x1xf32>
      %35 = math.absf %29 : vector<2x1xf32>
      %cst_24 = arith.constant 0.000000e+00 : f32
      %36 = vector.broadcast %cst_24 : f32 to vector<2x1xf32>
      %37 = arith.subf %36, %35 : vector<2x1xf32>
      %38 = math.exp %37 : vector<2x1xf32>
      %39 = math.log1p %38 : vector<2x1xf32>
      %40 = arith.addf %34, %39 : vector<2x1xf32>
      %41 = vector.shape_cast %40 : vector<2x1xf32> to vector<1x2x1xf32>
      %cst_25 = arith.constant dense<0.000000e+00> : vector<1xf32>
      %42 = vector.multi_reduction <add>, %41, %cst_25 [1, 2] : vector<1x2x1xf32> to vector<1xf32>
      %43 = vector.shape_cast %42 : vector<1xf32> to vector<1x1x1xf32>
      %44 = vector.extract %43[0, 0, 0] : f32 from vector<1x1x1xf32>
      %45 = vector.broadcast %44 : f32 to vector<1x1xf32>
      %cst_26 = arith.constant 2.000000e+00 : f32
      %46 = vector.broadcast %cst_26 : f32 to vector<1x1xf32>
      %47 = arith.divf %45, %46 : vector<1x1xf32>
      %c0_27 = arith.constant 0 : index
      %c0_28 = arith.constant 0 : index
      %48 = vector.load %arg8[%c0_27, %c0_28] : memref<1x1xf32, #tpu.memory_space<vmem>>, vector<1x1xf32>
      tpu.vector_store %arg8[%c0_27, %c0_28], %47 {strides = array<i32>} : memref<1x1xf32, #tpu.memory_space<vmem>>, vector<1x1xf32>,
      %49 = arith.negf %29 : vector<2x1xf32>
      %50 = math.exp %49 : vector<2x1xf32>
      %cst_29 = arith.constant 1.000000e+00 : f32
      %51 = vector.broadcast %cst_29 : f32 to vector<2x1xf32>
      %52 = arith.addf %51, %50 : vector<2x1xf32>
      %53 = arith.divf %51, %52 : vector<2x1xf32>
      %54 = arith.cmpf one, %53, %53 : vector<2x1xf32>
      %cst_30 = arith.constant 0.000000e+00 : f32
      %55 = vector.broadcast %cst_30 : f32 to vector<2x1xf32>
      %56 = arith.select %54, %55, %53 : vector<2x1xi1>, vector<2x1xf32>
      %cst_31 = arith.constant 0x7F800000 : f32
      %57 = vector.broadcast %cst_31 : f32 to vector<2x1xf32>
      %58 = arith.cmpf oeq, %56, %57 : vector<2x1xf32>
      %cst_32 = arith.constant 3.40282347E+38 : f32
      %59 = vector.broadcast %cst_32 : f32 to vector<2x1xf32>
      %60 = arith.select %58, %59, %56 : vector<2x1xi1>, vector<2x1xf32>
      %cst_33 = arith.constant 0xFF800000 : f32
      %61 = vector.broadcast %cst_33 : f32 to vector<2x1xf32>
      %62 = arith.cmpf oeq, %60, %61 : vector<2x1xf32>
      %cst_34 = arith.constant -3.40282347E+38 : f32
      %63 = vector.broadcast %cst_34 : f32 to vector<2x1xf32>
      %64 = arith.select %62, %63, %60 : vector<2x1xi1>, vector<2x1xf32>
      %c0_35 = arith.constant 0 : index
      %c0_36 = arith.constant 0 : index
      %65 = vector.load %arg7[%c0_35, %c0_36] : memref<2x1xf32, #tpu.memory_space<vmem>>, vector<2x1xf32>
      tpu.vector_store %arg7[%c0_35, %c0_36], %64 {strides = array<i32>} : memref<2x1xf32, #tpu.memory_space<vmem>>, vector<2x1xf32>,
    } else {
    }
    return
  }
  func.func @transform_0(%arg0: i32) -> (i32, i32) {
    %c0_i32 = arith.constant 0 : i32
    %c0_i32_0 = arith.constant 0 : i32
    return %c0_i32, %arg0 : i32, i32
  }
  func.func @transform_1(%arg0: i32) -> (i32, i32) {
    %c0_i32 = arith.constant 0 : i32
    %c0_i32_0 = arith.constant 0 : i32
    return %arg0, %c0_i32 : i32, i32
  }
  func.func @transform_2(%arg0: i32) -> (i32, i32) {
    %c0_i32 = arith.constant 0 : i32
    %c0_i32_0 = arith.constant 0 : i32
    %c0_i32_1 = arith.constant 0 : i32
    return %c0_i32, %c0_i32_0 : i32, i32
  }
  func.func @transform_3(%arg0: i32) -> (i32, i32) {
    %c0_i32 = arith.constant 0 : i32
    %c0_i32_0 = arith.constant 0 : i32
    %c0_i32_1 = arith.constant 0 : i32
    return %c0_i32, %c0_i32_0 : i32, i32
  }
  func.func @transform_4(%arg0: i32) -> (i32, i32) {
    %c0_i32 = arith.constant 0 : i32
    %c0_i32_0 = arith.constant 0 : i32
    %c0_i32_1 = arith.constant 0 : i32
    return %c0_i32, %c0_i32_0 : i32, i32
  }
  func.func @transform_5(%arg0: i32) -> (i32, i32) {
    %c0_i32 = arith.constant 0 : i32
    %c0_i32_0 = arith.constant 0 : i32
    %c0_i32_1 = arith.constant 0 : i32
    return %c0_i32, %c0_i32_0 : i32, i32
  }
  func.func @transform_6(%arg0: i32) -> (i32, i32) {
    %c0_i32 = arith.constant 0 : i32
    %c0_i32_0 = arith.constant 0 : i32
    %c0_i32_1 = arith.constant 0 : i32
    return %c0_i32, %c0_i32_0 : i32, i32
  }
  func.func @transform_7(%arg0: i32) -> (i32, i32) {
    %c0_i32 = arith.constant 0 : i32
    %c0_i32_0 = arith.constant 0 : i32
    %c0_i32_1 = arith.constant 0 : i32
    return %c0_i32, %c0_i32_0 : i32, i32
  }
}

</mosaic_0001>

<llo_original>
// kernel: net_forward.1
$region0: #{net_forward.1}
  #allocation0 [shape = 'u32[]', space=smem, size = 0x4, offset = 0x4, fixed_abs, tag = 'smem constant byte address 0x4 - core index']
  #allocation1 [shape = 'u32[144,128]{1,0:T(1,128)}', space=vmem, size = 0x12000, scoped, tag = 'internal scratch']
  #allocation2 [shape = 'f32[2,1024]{1,0:T(2,128)}', space=vmem, size = 0x2000, scoped, tag = 'scratch operand']
  #allocation3 [shape = 'f32[1,1]{1,0:T(1,128)S(1)}', space=vmem, size = 0x200, scoped, tag = 'scoped memory for net_forward.1']
  %s0 = inlined_call_operand.vmem [shape: f32[2,256], index: 0, kind: input, shape index: {}]
  %s1 = inlined_call_operand.hbm [shape: bf16[256,1024], index: 1, kind: input, shape index: {}]
  %s2 = inlined_call_operand.vmem [shape: f32[1,1024], index: 2, kind: input, shape index: {}]
  %s3 = inlined_call_operand.vmem [shape: f32[1,1024], index: 3, kind: input, shape index: {}]
  %s4 = inlined_call_operand.<no memory space> [shape: f32[1,1], index: 4, kind: input, shape index: {}]
  %s5 = inlined_call_operand.vmem [shape: f32[2,1], index: 5, kind: input, shape index: {}]
  %s6 = inlined_call_operand.vmem [shape: f32[2,1], index: 6, kind: output, shape index: {0}]
  %s7 = inlined_call_operand.hbm [shape: f32[1,1], index: 7, kind: output, shape index: {1}]
  %8 = xla_tuple %s6, %s7
  %s9 = sld [smem:[#allocation0]]
  $region54: #{net_forward.1} parent=0
    _
  %s11 = ssub.s32 1, %s9
  %s12 = scalar_select 0, %s11, %s9
  %v13 = vstv %s4
  %14 = vst [vmem:[#allocation3] sm:$0x1] %v13
  $region1: #{net_forward.1} parent=0
    #allocation4 [shape = 'u8[524288]{0}', space=vmem, size = 0x80000, scoped, tag = 'input window, operand 1, single buffered']
    #allocation5 [shape = 's32[1]{0}', space=sflag, size = 0x4, scoped, tag = 'scoped memory for net_forward.1']
    #allocation6 [shape = 's32[1]{0}', space=sflag, size = 0x4, scoped, tag = 'scoped memory for net_forward.1']
    #allocation7 [shape = 'u8[512]{0}', space=vmem, size = 0x400, scoped, tag = 'output window, operand 1, single buffered']
    %15 = vsyncpa [#allocation5], 0
    %16 = vsyncpa [#allocation6], 0
    // Predicated region
    $region2: #{net_forward.1} parent=1 // pred_check
      _
    $region3: #{net_forward.1} parent=1 // pred_check_branch
      %18 = sbr.rel (0) target = $region5
    $region4: #{net_forward.1} parent=1 // pred_region
      _
    $region5: #{net_forward.1} parent=1 // pred_fallthru
      _
    // Predicated region
    $region6: #{net_forward.1} parent=1 // pred_check
      _
    $region7: #{net_forward.1} parent=1 // pred_check_branch
      %20 = sbr.rel (0) target = $region9
    $region8: #{net_forward.1} parent=1 // pred_region
      %s22 = ssub.s32 16384, 16384
      %23 = vsyncadd [#allocation5], %s22
      %s24 = sshll.u32 [#allocation4], 4
      %s25 = int_to_ptr.vmem [resolvable:$true] %s24
      %30 = dma.hbm_to_vmem [thread:$0]  %s1, 16384, %s25, [#allocation5], 512, 512, 32
    $region9: #{net_forward.1} parent=1 // pred_fallthru
      _
    // Predicated region
    $region10: #{net_forward.1} parent=1 // pred_check
      _
    $region11: #{net_forward.1} parent=1 // pred_check_branch
      %32 = sbr.rel (0) target = $region13
    $region12: #{net_forward.1} parent=1 // pred_region
      _
    $region13: #{net_forward.1} parent=1 // pred_fallthru
      _
    // Predicated region
    $region14: #{net_forward.1} parent=1 // pred_check
      _
    $region15: #{net_forward.1} parent=1 // pred_check_branch
      %34 = sbr.rel (0) target = $region17
    $region16: #{net_forward.1} parent=1 // pred_region
      _
    $region17: #{net_forward.1} parent=1 // pred_fallthru
      _
    // Predicated region
    $region18: #{net_forward.1} parent=1 // pred_check
      _
    $region19: #{net_forward.1} parent=1 // pred_check_branch
      %36 = sbr.rel (0) target = $region21
    $region20: #{net_forward.1} parent=1 // pred_region
      _
    $region21: #{net_forward.1} parent=1 // pred_fallthru
      _
    // Predicated region
    $region22: #{net_forward.1} parent=1 // pred_check
      _
    $region23: #{net_forward.1} parent=1 // pred_check_branch
      %38 = sbr.rel (0) target = $region25
    $region24: #{net_forward.1} parent=1 // pred_region
      _
    $region25: #{net_forward.1} parent=1 // pred_fallthru
      _
    // Predicated region
    $region26: #{net_forward.1} parent=1 // pred_check
      _
    $region27: #{net_forward.1} parent=1 // pred_check_branch
      %40 = sbr.rel (0) target = $region29
    $region28: #{net_forward.1} parent=1 // pred_region
      %41 = dma.done [#allocation5], 16384
    $region29: #{net_forward.1} parent=1 // pred_fallthru
      _
    %p42 = scmp.eq.s32.totalorder 0, 0
    // Predicated region
    $region30: #{net_forward.1} parent=1 // pred_check
      %p43 = pneg %p42
    $region31: #{net_forward.1} parent=1 // pred_check_branch
      %45 = sbr.rel (%p43) target = $region33
    $region32: #{net_forward.1} parent=1 // pred_region
      %46 = vst [vmem:[#allocation2] sm:$0xff] 0.0
      %47 = vst [vmem:[#allocation2 + $0x8] sm:$0xff] 0.0
    $region33: #{net_forward.1} parent=1 // pred_fallthru
      _
    %v48 = vld [vmem:[%s0] sm:$0xf]
    %v49 = vmul.f32 %v48, 2.0
    %v50 = vsub.f32 %v49, 1.0
    %v53 = vunpack.c.l.s4 1983009808
    %v54 = vunpack.c.0.s8 %v53
    %v55 = vlaneseq
    %v56 = vshrl.u32 %v55, 7
    %v57 = vsub.s32 %v54, %v56
    %v58 = vrot.slane %v50, %v57
    %v59 = vcombine.high %v58, %v58
    %v62 = vpack.c.bf16 %v58, %v58
    %v63 = vpack.c.bf16 %v59, %v59
    %v64 = vld [vmem:[#allocation2] sm:$0xff]
    %v65 = vld [vmem:[#allocation2 + $0x8] sm:$0xff]
    %v66 = vld [vmem:[#allocation4] sm:$0xff]
    %v67 = vld [vmem:[#allocation4 + $0x8] sm:$0xff]
    %v68 = vld [vmem:[#allocation4 + $0x10] sm:$0xff]
    %v69 = vld [vmem:[#allocation4 + $0x18] sm:$0xff]
    %v70 = vld [vmem:[#allocation4 + $0x20] sm:$0xff]
    %v71 = vld [vmem:[#allocation4 + $0x28] sm:$0xff]
    %v72 = vld [vmem:[#allocation4 + $0x30] sm:$0xff]
    %v73 = vld [vmem:[#allocation4 + $0x38] sm:$0xff]
    %v74 = vld [vmem:[#allocation4 + $0x40] sm:$0xff]
    %v75 = vld [vmem:[#allocation4 + $0x48] sm:$0xff]
    %v76 = vld [vmem:[#allocation4 + $0x50] sm:$0xff]
    %v77 = vld [vmem:[#allocation4 + $0x58] sm:$0xff]
    %v78 = vld [vmem:[#allocation4 + $0x60] sm:$0xff]
    %v79 = vld [vmem:[#allocation4 + $0x68] sm:$0xff]
    %v80 = vld [vmem:[#allocation4 + $0x70] sm:$0xff]
    %v81 = vld [vmem:[#allocation4 + $0x78] sm:$0xff]
    %v82 = vld [vmem:[#allocation4 + $0x80] sm:$0xff]
    %v83 = vld [vmem:[#allocation4 + $0x88] sm:$0xff]
    %v84 = vld [vmem:[#allocation4 + $0x90] sm:$0xff]
    %v85 = vld [vmem:[#allocation4 + $0x98] sm:$0xff]
    %v86 = vld [vmem:[#allocation4 + $0xa0] sm:$0xff]
    %v87 = vld [vmem:[#allocation4 + $0xa8] sm:$0xff]
    %v88 = vld [vmem:[#allocation4 + $0xb0] sm:$0xff]
    %v89 = vld [vmem:[#allocation4 + $0xb8] sm:$0xff]
    %v90 = vld [vmem:[#allocation4 + $0xc0] sm:$0xff]
    %v91 = vld [vmem:[#allocation4 + $0xc8] sm:$0xff]
    %v92 = vld [vmem:[#allocation4 + $0xd0] sm:$0xff]
    %v93 = vld [vmem:[#allocation4 + $0xd8] sm:$0xff]
    %v94 = vld [vmem:[#allocation4 + $0xe0] sm:$0xff]
    %v95 = vld [vmem:[#allocation4 + $0xe8] sm:$0xff]
    %v96 = vld [vmem:[#allocation4 + $0xf0] sm:$0xff]
    %v97 = vld [vmem:[#allocation4 + $0xf8] sm:$0xff]
    %v98 = vld [vmem:[#allocation4 + $0x100] sm:$0xff]
    %v99 = vld [vmem:[#allocation4 + $0x108] sm:$0xff]
    %v100 = vld [vmem:[#allocation4 + $0x110] sm:$0xff]
    %v101 = vld [vmem:[#allocation4 + $0x118] sm:$0xff]
    %v102 = vld [vmem:[#allocation4 + $0x120] sm:$0xff]
    %v103 = vld [vmem:[#allocation4 + $0x128] sm:$0xff]
    %v104 = vld [vmem:[#allocation4 + $0x130] sm:$0xff]
    %v105 = vld [vmem:[#allocation4 + $0x138] sm:$0xff]
    %v106 = vld [vmem:[#allocation4 + $0x140] sm:$0xff]
    %v107 = vld [vmem:[#allocation4 + $0x148] sm:$0xff]
    %v108 = vld [vmem:[#allocation4 + $0x150] sm:$0xff]
    %v109 = vld [vmem:[#allocation4 + $0x158] sm:$0xff]
    %v110 = vld [vmem:[#allocation4 + $0x160] sm:$0xff]
    %v111 = vld [vmem:[#allocation4 + $0x168] sm:$0xff]
    %v112 = vld [vmem:[#allocation4 + $0x170] sm:$0xff]
    %v113 = vld [vmem:[#allocation4 + $0x178] sm:$0xff]
    %v114 = vld [vmem:[#allocation4 + $0x180] sm:$0xff]
    %v115 = vld [vmem:[#allocation4 + $0x188] sm:$0xff]
    %v116 = vld [vmem:[#allocation4 + $0x190] sm:$0xff]
    %v117 = vld [vmem:[#allocation4 + $0x198] sm:$0xff]
    %v118 = vld [vmem:[#allocation4 + $0x1a0] sm:$0xff]
    %v119 = vld [vmem:[#allocation4 + $0x1a8] sm:$0xff]
    %v120 = vld [vmem:[#allocation4 + $0x1b0] sm:$0xff]
    %v121 = vld [vmem:[#allocation4 + $0x1b8] sm:$0xff]
    %v122 = vld [vmem:[#allocation4 + $0x1c0] sm:$0xff]
    %v123 = vld [vmem:[#allocation4 + $0x1c8] sm:$0xff]
    %v124 = vld [vmem:[#allocation4 + $0x1d0] sm:$0xff]
    %v125 = vld [vmem:[#allocation4 + $0x1d8] sm:$0xff]
    %v126 = vld [vmem:[#allocation4 + $0x1e0] sm:$0xff]
    %v127 = vld [vmem:[#allocation4 + $0x1e8] sm:$0xff]
    %v128 = vld [vmem:[#allocation4 + $0x1f0] sm:$0xff]
    %v129 = vld [vmem:[#allocation4 + $0x1f8] sm:$0xff]
    %v130 = vld [vmem:[#allocation4 + $0x200] sm:$0xff]
    %v131 = vld [vmem:[#allocation4 + $0x208] sm:$0xff]
    %v132 = vld [vmem:[#allocation4 + $0x210] sm:$0xff]
    %v133 = vld [vmem:[#allocation4 + $0x218] sm:$0xff]
    %v134 = vld [vmem:[#allocation4 + $0x220] sm:$0xff]
    %v135 = vld [vmem:[#allocation4 + $0x228] sm:$0xff]
    %v136 = vld [vmem:[#allocation4 + $0x230] sm:$0xff]
    %v137 = vld [vmem:[#allocation4 + $0x238] sm:$0xff]
    %v138 = vld [vmem:[#allocation4 + $0x240] sm:$0xff]
    %v139 = vld [vmem:[#allocation4 + $0x248] sm:$0xff]
    %v140 = vld [vmem:[#allocation4 + $0x250] sm:$0xff]
    %v141 = vld [vmem:[#allocation4 + $0x258] sm:$0xff]
    %v142 = vld [vmem:[#allocation4 + $0x260] sm:$0xff]
    %v143 = vld [vmem:[#allocation4 + $0x268] sm:$0xff]
    %v144 = vld [vmem:[#allocation4 + $0x270] sm:$0xff]
    %v145 = vld [vmem:[#allocation4 + $0x278] sm:$0xff]
    %v146 = vld [vmem:[#allocation4 + $0x280] sm:$0xff]
    %v147 = vld [vmem:[#allocation4 + $0x288] sm:$0xff]
    %v148 = vld [vmem:[#allocation4 + $0x290] sm:$0xff]
    %v149 = vld [vmem:[#allocation4 + $0x298] sm:$0xff]
    %v150 = vld [vmem:[#allocation4 + $0x2a0] sm:$0xff]
    %v151 = vld [vmem:[#allocation4 + $0x2a8] sm:$0xff]
    %v152 = vld [vmem:[#allocation4 + $0x2b0] sm:$0xff]
    %v153 = vld [vmem:[#allocation4 + $0x2b8] sm:$0xff]
    %v154 = vld [vmem:[#allocation4 + $0x2c0] sm:$0xff]
    %v155 = vld [vmem:[#allocation4 + $0x2c8] sm:$0xff]
    %v156 = vld [vmem:[#allocation4 + $0x2d0] sm:$0xff]
    %v157 = vld [vmem:[#allocation4 + $0x2d8] sm:$0xff]
    %v158 = vld [vmem:[#allocation4 + $0x2e0] sm:$0xff]
    %v159 = vld [vmem:[#allocation4 + $0x2e8] sm:$0xff]
    %v160 = vld [vmem:[#allocation4 + $0x2f0] sm:$0xff]
    %v161 = vld [vmem:[#allocation4 + $0x2f8] sm:$0xff]
    %v162 = vld [vmem:[#allocation4 + $0x300] sm:$0xff]
    %v163 = vld [vmem:[#allocation4 + $0x308] sm:$0xff]
    %v164 = vld [vmem:[#allocation4 + $0x310] sm:$0xff]
    %v165 = vld [vmem:[#allocation4 + $0x318] sm:$0xff]
    %v166 = vld [vmem:[#allocation4 + $0x320] sm:$0xff]
    %v167 = vld [vmem:[#allocation4 + $0x328] sm:$0xff]
    %v168 = vld [vmem:[#allocation4 + $0x330] sm:$0xff]
    %v169 = vld [vmem:[#allocation4 + $0x338] sm:$0xff]
    %v170 = vld [vmem:[#allocation4 + $0x340] sm:$0xff]
    %v171 = vld [vmem:[#allocation4 + $0x348] sm:$0xff]
    %v172 = vld [vmem:[#allocation4 + $0x350] sm:$0xff]
    %v173 = vld [vmem:[#allocation4 + $0x358] sm:$0xff]
    %v174 = vld [vmem:[#allocation4 + $0x360] sm:$0xff]
    %v175 = vld [vmem:[#allocation4 + $0x368] sm:$0xff]
    %v176 = vld [vmem:[#allocation4 + $0x370] sm:$0xff]
    %v177 = vld [vmem:[#allocation4 + $0x378] sm:$0xff]
    %v178 = vld [vmem:[#allocation4 + $0x380] sm:$0xff]
    %v179 = vld [vmem:[#allocation4 + $0x388] sm:$0xff]
    %v180 = vld [vmem:[#allocation4 + $0x390] sm:$0xff]
    %v181 = vld [vmem:[#allocation4 + $0x398] sm:$0xff]
    %v182 = vld [vmem:[#allocation4 + $0x3a0] sm:$0xff]
    %v183 = vld [vmem:[#allocation4 + $0x3a8] sm:$0xff]
    %v184 = vld [vmem:[#allocation4 + $0x3b0] sm:$0xff]
    %v185 = vld [vmem:[#allocation4 + $0x3b8] sm:$0xff]
    %v186 = vld [vmem:[#allocation4 + $0x3c0] sm:$0xff]
    %v187 = vld [vmem:[#allocation4 + $0x3c8] sm:$0xff]
    %v188 = vld [vmem:[#allocation4 + $0x3d0] sm:$0xff]
    %v189 = vld [vmem:[#allocation4 + $0x3d8] sm:$0xff]
    %v190 = vld [vmem:[#allocation4 + $0x3e0] sm:$0xff]
    %v191 = vld [vmem:[#allocation4 + $0x3e8] sm:$0xff]
    %v192 = vld [vmem:[#allocation4 + $0x3f0] sm:$0xff]
    %v193 = vld [vmem:[#allocation4 + $0x3f8] sm:$0xff]
    %v322 = vunpack.c.l.b16 %v66
    %v323 = vunpack.c.h.b16 %v66
    %v324 = vunpack.c.l.b16 %v67
    %v325 = vunpack.c.h.b16 %v67
    %v326 = vunpack.c.l.b16 %v68
    %v327 = vunpack.c.h.b16 %v68
    %v328 = vunpack.c.l.b16 %v69
    %v329 = vunpack.c.h.b16 %v69
    %v330 = vunpack.c.l.b16 %v70
    %v331 = vunpack.c.h.b16 %v70
    %v332 = vunpack.c.l.b16 %v71
    %v333 = vunpack.c.h.b16 %v71
    %v334 = vunpack.c.l.b16 %v72
    %v335 = vunpack.c.h.b16 %v72
    %v336 = vunpack.c.l.b16 %v73
    %v337 = vunpack.c.h.b16 %v73
    %v338 = vunpack.c.l.b16 %v74
    %v339 = vunpack.c.h.b16 %v74
    %v340 = vunpack.c.l.b16 %v75
    %v341 = vunpack.c.h.b16 %v75
    %v342 = vunpack.c.l.b16 %v76
    %v343 = vunpack.c.h.b16 %v76
    %v344 = vunpack.c.l.b16 %v77
    %v345 = vunpack.c.h.b16 %v77
    %v346 = vunpack.c.l.b16 %v78
    %v347 = vunpack.c.h.b16 %v78
    %v348 = vunpack.c.l.b16 %v79
    %v349 = vunpack.c.h.b16 %v79
    %v350 = vunpack.c.l.b16 %v80
    %v351 = vunpack.c.h.b16 %v80
    %v352 = vunpack.c.l.b16 %v81
    %v353 = vunpack.c.h.b16 %v81
    %v354 = vunpack.c.l.b16 %v82
    %v355 = vunpack.c.h.b16 %v82
    %v356 = vunpack.c.l.b16 %v83
    %v357 = vunpack.c.h.b16 %v83
    %v358 = vunpack.c.l.b16 %v84
    %v359 = vunpack.c.h.b16 %v84
    %v360 = vunpack.c.l.b16 %v85
    %v361 = vunpack.c.h.b16 %v85
    %v362 = vunpack.c.l.b16 %v86
    %v363 = vunpack.c.h.b16 %v86
    %v364 = vunpack.c.l.b16 %v87
    %v365 = vunpack.c.h.b16 %v87
    %v366 = vunpack.c.l.b16 %v88
    %v367 = vunpack.c.h.b16 %v88
    %v368 = vunpack.c.l.b16 %v89
    %v369 = vunpack.c.h.b16 %v89
    %v370 = vunpack.c.l.b16 %v90
    %v371 = vunpack.c.h.b16 %v90
    %v372 = vunpack.c.l.b16 %v91
    %v373 = vunpack.c.h.b16 %v91
    %v374 = vunpack.c.l.b16 %v92
    %v375 = vunpack.c.h.b16 %v92
    %v376 = vunpack.c.l.b16 %v93
    %v377 = vunpack.c.h.b16 %v93
    %v378 = vunpack.c.l.b16 %v94
    %v379 = vunpack.c.h.b16 %v94
    %v380 = vunpack.c.l.b16 %v95
    %v381 = vunpack.c.h.b16 %v95
    %v382 = vunpack.c.l.b16 %v96
    %v383 = vunpack.c.h.b16 %v96
    %v384 = vunpack.c.l.b16 %v97
    %v385 = vunpack.c.h.b16 %v97
    %v386 = vunpack.c.l.b16 %v98
    %v387 = vunpack.c.h.b16 %v98
    %v388 = vunpack.c.l.b16 %v99
    %v389 = vunpack.c.h.b16 %v99
    %v390 = vunpack.c.l.b16 %v100
    %v391 = vunpack.c.h.b16 %v100
    %v392 = vunpack.c.l.b16 %v101
    %v393 = vunpack.c.h.b16 %v101
    %v394 = vunpack.c.l.b16 %v102
    %v395 = vunpack.c.h.b16 %v102
    %v396 = vunpack.c.l.b16 %v103
    %v397 = vunpack.c.h.b16 %v103
    %v398 = vunpack.c.l.b16 %v104
    %v399 = vunpack.c.h.b16 %v104
    %v400 = vunpack.c.l.b16 %v105
    %v401 = vunpack.c.h.b16 %v105
    %v402 = vunpack.c.l.b16 %v106
    %v403 = vunpack.c.h.b16 %v106
    %v404 = vunpack.c.l.b16 %v107
    %v405 = vunpack.c.h.b16 %v107
    %v406 = vunpack.c.l.b16 %v108
    %v407 = vunpack.c.h.b16 %v108
    %v408 = vunpack.c.l.b16 %v109
    %v409 = vunpack.c.h.b16 %v109
    %v410 = vunpack.c.l.b16 %v110
    %v411 = vunpack.c.h.b16 %v110
    %v412 = vunpack.c.l.b16 %v111
    %v413 = vunpack.c.h.b16 %v111
    %v414 = vunpack.c.l.b16 %v112
    %v415 = vunpack.c.h.b16 %v112
    %v416 = vunpack.c.l.b16 %v113
    %v417 = vunpack.c.h.b16 %v113
    %v418 = vunpack.c.l.b16 %v114
    %v419 = vunpack.c.h.b16 %v114
    %v420 = vunpack.c.l.b16 %v115
    %v421 = vunpack.c.h.b16 %v115
    %v422 = vunpack.c.l.b16 %v116
    %v423 = vunpack.c.h.b16 %v116
    %v424 = vunpack.c.l.b16 %v117
    %v425 = vunpack.c.h.b16 %v117
    %v426 = vunpack.c.l.b16 %v118
    %v427 = vunpack.c.h.b16 %v118
    %v428 = vunpack.c.l.b16 %v119
    %v429 = vunpack.c.h.b16 %v119
    %v430 = vunpack.c.l.b16 %v120
    %v431 = vunpack.c.h.b16 %v120
    %v432 = vunpack.c.l.b16 %v121
    %v433 = vunpack.c.h.b16 %v121
    %v434 = vunpack.c.l.b16 %v122
    %v435 = vunpack.c.h.b16 %v122
    %v436 = vunpack.c.l.b16 %v123
    %v437 = vunpack.c.h.b16 %v123
    %v438 = vunpack.c.l.b16 %v124
    %v439 = vunpack.c.h.b16 %v124
    %v440 = vunpack.c.l.b16 %v125
    %v441 = vunpack.c.h.b16 %v125
    %v442 = vunpack.c.l.b16 %v126
    %v443 = vunpack.c.h.b16 %v126
    %v444 = vunpack.c.l.b16 %v127
    %v445 = vunpack.c.h.b16 %v127
    %v446 = vunpack.c.l.b16 %v128
    %v447 = vunpack.c.h.b16 %v128
    %v448 = vunpack.c.l.b16 %v129
    %v449 = vunpack.c.h.b16 %v129
    %v450 = vunpack.c.l.b16 %v130
    %v451 = vunpack.c.h.b16 %v130
    %v452 = vunpack.c.l.b16 %v131
    %v453 = vunpack.c.h.b16 %v131
    %v454 = vunpack.c.l.b16 %v132
    %v455 = vunpack.c.h.b16 %v132
    %v456 = vunpack.c.l.b16 %v133
    %v457 = vunpack.c.h.b16 %v133
    %v458 = vunpack.c.l.b16 %v134
    %v459 = vunpack.c.h.b16 %v134
    %v460 = vunpack.c.l.b16 %v135
    %v461 = vunpack.c.h.b16 %v135
    %v462 = vunpack.c.l.b16 %v136
    %v463 = vunpack.c.h.b16 %v136
    %v464 = vunpack.c.l.b16 %v137
    %v465 = vunpack.c.h.b16 %v137
    %v466 = vunpack.c.l.b16 %v138
    %v467 = vunpack.c.h.b16 %v138
    %v468 = vunpack.c.l.b16 %v139
    %v469 = vunpack.c.h.b16 %v139
    %v470 = vunpack.c.l.b16 %v140
    %v471 = vunpack.c.h.b16 %v140
    %v472 = vunpack.c.l.b16 %v141
    %v473 = vunpack.c.h.b16 %v141
    %v474 = vunpack.c.l.b16 %v142
    %v475 = vunpack.c.h.b16 %v142
    %v476 = vunpack.c.l.b16 %v143
    %v477 = vunpack.c.h.b16 %v143
    %v478 = vunpack.c.l.b16 %v144
    %v479 = vunpack.c.h.b16 %v144
    %v480 = vunpack.c.l.b16 %v145
    %v481 = vunpack.c.h.b16 %v145
    %v482 = vunpack.c.l.b16 %v146
    %v483 = vunpack.c.h.b16 %v146
    %v484 = vunpack.c.l.b16 %v147
    %v485 = vunpack.c.h.b16 %v147
    %v486 = vunpack.c.l.b16 %v148
    %v487 = vunpack.c.h.b16 %v148
    %v488 = vunpack.c.l.b16 %v149
    %v489 = vunpack.c.h.b16 %v149
    %v490 = vunpack.c.l.b16 %v150
    %v491 = vunpack.c.h.b16 %v150
    %v492 = vunpack.c.l.b16 %v151
    %v493 = vunpack.c.h.b16 %v151
    %v494 = vunpack.c.l.b16 %v152
    %v495 = vunpack.c.h.b16 %v152
    %v496 = vunpack.c.l.b16 %v153
    %v497 = vunpack.c.h.b16 %v153
    %v498 = vunpack.c.l.b16 %v154
    %v499 = vunpack.c.h.b16 %v154
    %v500 = vunpack.c.l.b16 %v155
    %v501 = vunpack.c.h.b16 %v155
    %v502 = vunpack.c.l.b16 %v156
    %v503 = vunpack.c.h.b16 %v156
    %v504 = vunpack.c.l.b16 %v157
    %v505 = vunpack.c.h.b16 %v157
    %v506 = vunpack.c.l.b16 %v158
    %v507 = vunpack.c.h.b16 %v158
    %v508 = vunpack.c.l.b16 %v159
    %v509 = vunpack.c.h.b16 %v159
    %v510 = vunpack.c.l.b16 %v160
    %v511 = vunpack.c.h.b16 %v160
    %v512 = vunpack.c.l.b16 %v161
    %v513 = vunpack.c.h.b16 %v161
    %v514 = vunpack.c.l.b16 %v162
    %v515 = vunpack.c.h.b16 %v162
    %v516 = vunpack.c.l.b16 %v163
    %v517 = vunpack.c.h.b16 %v163
    %v518 = vunpack.c.l.b16 %v164
    %v519 = vunpack.c.h.b16 %v164
    %v520 = vunpack.c.l.b16 %v165
    %v521 = vunpack.c.h.b16 %v165
    %v522 = vunpack.c.l.b16 %v166
    %v523 = vunpack.c.h.b16 %v166
    %v524 = vunpack.c.l.b16 %v167
    %v525 = vunpack.c.h.b16 %v167
    %v526 = vunpack.c.l.b16 %v168
    %v527 = vunpack.c.h.b16 %v168
    %v528 = vunpack.c.l.b16 %v169
    %v529 = vunpack.c.h.b16 %v169
    %v530 = vunpack.c.l.b16 %v170
    %v531 = vunpack.c.h.b16 %v170
    %v532 = vunpack.c.l.b16 %v171
    %v533 = vunpack.c.h.b16 %v171
    %v534 = vunpack.c.l.b16 %v172
    %v535 = vunpack.c.h.b16 %v172
    %v536 = vunpack.c.l.b16 %v173
    %v537 = vunpack.c.h.b16 %v173
    %v538 = vunpack.c.l.b16 %v174
    %v539 = vunpack.c.h.b16 %v174
    %v540 = vunpack.c.l.b16 %v175
    %v541 = vunpack.c.h.b16 %v175
    %v542 = vunpack.c.l.b16 %v176
    %v543 = vunpack.c.h.b16 %v176
    %v544 = vunpack.c.l.b16 %v177
    %v545 = vunpack.c.h.b16 %v177
    %v546 = vunpack.c.l.b16 %v178
    %v547 = vunpack.c.h.b16 %v178
    %v548 = vunpack.c.l.b16 %v179
    %v549 = vunpack.c.h.b16 %v179
    %v550 = vunpack.c.l.b16 %v180
    %v551 = vunpack.c.h.b16 %v180
    %v552 = vunpack.c.l.b16 %v181
    %v553 = vunpack.c.h.b16 %v181
    %v554 = vunpack.c.l.b16 %v182
    %v555 = vunpack.c.h.b16 %v182
    %v556 = vunpack.c.l.b16 %v183
    %v557 = vunpack.c.h.b16 %v183
    %v558 = vunpack.c.l.b16 %v184
    %v559 = vunpack.c.h.b16 %v184
    %v560 = vunpack.c.l.b16 %v185
    %v561 = vunpack.c.h.b16 %v185
    %v562 = vunpack.c.l.b16 %v186
    %v563 = vunpack.c.h.b16 %v186
    %v564 = vunpack.c.l.b16 %v187
    %v565 = vunpack.c.h.b16 %v187
    %v566 = vunpack.c.l.b16 %v188
    %v567 = vunpack.c.h.b16 %v188
    %v568 = vunpack.c.l.b16 %v189
    %v569 = vunpack.c.h.b16 %v189
    %v570 = vunpack.c.l.b16 %v190
    %v571 = vunpack.c.h.b16 %v190
    %v572 = vunpack.c.l.b16 %v191
    %v573 = vunpack.c.h.b16 %v191
    %v574 = vunpack.c.l.b16 %v192
    %v575 = vunpack.c.h.b16 %v192
    %v576 = vunpack.c.l.b16 %v193
    %v577 = vunpack.c.h.b16 %v193
    %v578 = vpack.c.b16 %v330, %v322
    %v579 = vpack.c.b16 %v331, %v323
    %v580 = vpack.c.b16 %v332, %v324
    %v581 = vpack.c.b16 %v333, %v325
    %v582 = vpack.c.b16 %v334, %v326
    %v583 = vpack.c.b16 %v335, %v327
    %v584 = vpack.c.b16 %v336, %v328
    %v585 = vpack.c.b16 %v337, %v329
    %v586 = vpack.c.b16 %v346, %v338
    %v587 = vpack.c.b16 %v347, %v339
    %v588 = vpack.c.b16 %v348, %v340
    %v589 = vpack.c.b16 %v349, %v341
    %v590 = vpack.c.b16 %v350, %v342
    %v591 = vpack.c.b16 %v351, %v343
    %v592 = vpack.c.b16 %v352, %v344
    %v593 = vpack.c.b16 %v353, %v345
    %v594 = vpack.c.b16 %v362, %v354
    %v595 = vpack.c.b16 %v363, %v355
    %v596 = vpack.c.b16 %v364, %v356
    %v597 = vpack.c.b16 %v365, %v357
    %v598 = vpack.c.b16 %v366, %v358
    %v599 = vpack.c.b16 %v367, %v359
    %v600 = vpack.c.b16 %v368, %v360
    %v601 = vpack.c.b16 %v369, %v361
    %v602 = vpack.c.b16 %v378, %v370
    %v603 = vpack.c.b16 %v379, %v371
    %v604 = vpack.c.b16 %v380, %v372
    %v605 = vpack.c.b16 %v381, %v373
    %v606 = vpack.c.b16 %v382, %v374
    %v607 = vpack.c.b16 %v383, %v375
    %v608 = vpack.c.b16 %v384, %v376
    %v609 = vpack.c.b16 %v385, %v377
    %v610 = vpack.c.b16 %v394, %v386
    %v611 = vpack.c.b16 %v395, %v387
    %v612 = vpack.c.b16 %v396, %v388
    %v613 = vpack.c.b16 %v397, %v389
    %v614 = vpack.c.b16 %v398, %v390
    %v615 = vpack.c.b16 %v399, %v391
    %v616 = vpack.c.b16 %v400, %v392
    %v617 = vpack.c.b16 %v401, %v393
    %v618 = vpack.c.b16 %v410, %v402
    %v619 = vpack.c.b16 %v411, %v403
    %v620 = vpack.c.b16 %v412, %v404
    %v621 = vpack.c.b16 %v413, %v405
    %v622 = vpack.c.b16 %v414, %v406
    %v623 = vpack.c.b16 %v415, %v407
    %v624 = vpack.c.b16 %v416, %v408
    %v625 = vpack.c.b16 %v417, %v409
    %v626 = vpack.c.b16 %v426, %v418
    %v627 = vpack.c.b16 %v427, %v419
    %v628 = vpack.c.b16 %v428, %v420
    %v629 = vpack.c.b16 %v429, %v421
    %v630 = vpack.c.b16 %v430, %v422
    %v631 = vpack.c.b16 %v431, %v423
    %v632 = vpack.c.b16 %v432, %v424
    %v633 = vpack.c.b16 %v433, %v425
    %v634 = vpack.c.b16 %v442, %v434
    %v635 = vpack.c.b16 %v443, %v435
    %v636 = vpack.c.b16 %v444, %v436
    %v637 = vpack.c.b16 %v445, %v437
    %v638 = vpack.c.b16 %v446, %v438
    %v639 = vpack.c.b16 %v447, %v439
    %v640 = vpack.c.b16 %v448, %v440
    %v641 = vpack.c.b16 %v449, %v441
    %v642 = vpack.c.b16 %v458, %v450
    %v643 = vpack.c.b16 %v459, %v451
    %v644 = vpack.c.b16 %v460, %v452
    %v645 = vpack.c.b16 %v461, %v453
    %v646 = vpack.c.b16 %v462, %v454
    %v647 = vpack.c.b16 %v463, %v455
    %v648 = vpack.c.b16 %v464, %v456
    %v649 = vpack.c.b16 %v465, %v457
    %v650 = vpack.c.b16 %v474, %v466
    %v651 = vpack.c.b16 %v475, %v467
    %v652 = vpack.c.b16 %v476, %v468
    %v653 = vpack.c.b16 %v477, %v469
    %v654 = vpack.c.b16 %v478, %v470
    %v655 = vpack.c.b16 %v479, %v471
    %v656 = vpack.c.b16 %v480, %v472
    %v657 = vpack.c.b16 %v481, %v473
    %v658 = vpack.c.b16 %v490, %v482
    %v659 = vpack.c.b16 %v491, %v483
    %v660 = vpack.c.b16 %v492, %v484
    %v661 = vpack.c.b16 %v493, %v485
    %v662 = vpack.c.b16 %v494, %v486
    %v663 = vpack.c.b16 %v495, %v487
    %v664 = vpack.c.b16 %v496, %v488
    %v665 = vpack.c.b16 %v497, %v489
    %v666 = vpack.c.b16 %v506, %v498
    %v667 = vpack.c.b16 %v507, %v499
    %v668 = vpack.c.b16 %v508, %v500
    %v669 = vpack.c.b16 %v509, %v501
    %v670 = vpack.c.b16 %v510, %v502
    %v671 = vpack.c.b16 %v511, %v503
    %v672 = vpack.c.b16 %v512, %v504
    %v673 = vpack.c.b16 %v513, %v505
    %v674 = vpack.c.b16 %v522, %v514
    %v675 = vpack.c.b16 %v523, %v515
    %v676 = vpack.c.b16 %v524, %v516
    %v677 = vpack.c.b16 %v525, %v517
    %v678 = vpack.c.b16 %v526, %v518
    %v679 = vpack.c.b16 %v527, %v519
    %v680 = vpack.c.b16 %v528, %v520
    %v681 = vpack.c.b16 %v529, %v521
    %v682 = vpack.c.b16 %v538, %v530
    %v683 = vpack.c.b16 %v539, %v531
    %v684 = vpack.c.b16 %v540, %v532
    %v685 = vpack.c.b16 %v541, %v533
    %v686 = vpack.c.b16 %v542, %v534
    %v687 = vpack.c.b16 %v543, %v535
    %v688 = vpack.c.b16 %v544, %v536
    %v689 = vpack.c.b16 %v545, %v537
    %v690 = vpack.c.b16 %v554, %v546
    %v691 = vpack.c.b16 %v555, %v547
    %v692 = vpack.c.b16 %v556, %v548
    %v693 = vpack.c.b16 %v557, %v549
    %v694 = vpack.c.b16 %v558, %v550
    %v695 = vpack.c.b16 %v559, %v551
    %v696 = vpack.c.b16 %v560, %v552
    %v697 = vpack.c.b16 %v561, %v553
    %v698 = vpack.c.b16 %v570, %v562
    %v699 = vpack.c.b16 %v571, %v563
    %v700 = vpack.c.b16 %v572, %v564
    %v701 = vpack.c.b16 %v573, %v565
    %v702 = vpack.c.b16 %v574, %v566
    %v703 = vpack.c.b16 %v575, %v567
    %v704 = vpack.c.b16 %v576, %v568
    %v705 = vpack.c.b16 %v577, %v569
    %834 = vmatprep.subr.bf16.mxu0 %v635
    %835 = vmatpush1.bf16.msra.mxu0 %v634
    %836 = vmatprep.subr.bf16.mxu0 %v627
    %837 = vmatpush1.bf16.msra.mxu0 %v626
    %838 = vmatprep.subr.bf16.mxu0 %v619
    %839 = vmatpush1.bf16.msra.mxu0 %v618
    %840 = vmatprep.subr.bf16.mxu0 %v611
    %841 = vmatpush1.bf16.msra.mxu0 %v610
    %842 = vmatprep.subr.bf16.mxu0 %v603
    %843 = vmatpush1.bf16.msra.mxu0 %v602
    %844 = vmatprep.subr.bf16.mxu0 %v595
    %845 = vmatpush1.bf16.msra.mxu0 %v594
    %846 = vmatprep.subr.bf16.mxu0 %v587
    %847 = vmatpush1.bf16.msra.mxu0 %v586
    %848 = vmatprep.subr.bf16.mxu0 %v579
    %849 = vmatpush1.bf16.msra.mxu0 %v578
    %850 = vmatprep.subr.bf16.mxu0 %v699
    %851 = vmatpush2.bf16.msra.mxu0 %v698
    %852 = vmatprep.subr.bf16.mxu0 %v691
    %853 = vmatpush2.bf16.msra.mxu0 %v690
    %854 = vmatprep.subr.bf16.mxu0 %v683
    %855 = vmatpush2.bf16.msra.mxu0 %v682
    %856 = vmatprep.subr.bf16.mxu0 %v675
    %857 = vmatpush2.bf16.msra.mxu0 %v674
    %858 = vmatprep.subr.bf16.mxu0 %v667
    %859 = vmatpush2.bf16.msra.mxu0 %v666
    %860 = vmatprep.subr.bf16.mxu0 %v659
    %861 = vmatpush2.bf16.msra.mxu0 %v658
    %862 = vmatprep.subr.bf16.mxu0 %v651
    %863 = vmatpush2.bf16.msra.mxu0 %v650
    %864 = vmatprep.subr.bf16.mxu0 %v643
    %865 = vmatpush2.bf16.msra.mxu0 %v642
    %866 = vmatprep.mubr.bf16.mxu0 %v63
    %867 = vmatmul.mubr.bf16.gmra.mxu0 %v62
    %v868 = vpop.f32.mrf.mxu0
    %v869 = vadd.f32 0.0, %v868
    %v870 = vpop.f32.mrf.mxu0
    %v871 = vadd.f32 0.0, %v870
    %v872 = vpop.f32.mrf.mxu0
    %v873 = vpop.f32.mrf.mxu0
    %874 = vdwg.mxu0
    %875 = vmatprep.subr.bf16.mxu0 %v637
    %876 = vmatpush1.bf16.msra.mxu0 %v636
    %877 = vmatprep.subr.bf16.mxu0 %v629
    %878 = vmatpush1.bf16.msra.mxu0 %v628
    %879 = vmatprep.subr.bf16.mxu0 %v621
    %880 = vmatpush1.bf16.msra.mxu0 %v620
    %881 = vmatprep.subr.bf16.mxu0 %v613
    %882 = vmatpush1.bf16.msra.mxu0 %v612
    %883 = vmatprep.subr.bf16.mxu0 %v605
    %884 = vmatpush1.bf16.msra.mxu0 %v604
    %885 = vmatprep.subr.bf16.mxu0 %v597
    %886 = vmatpush1.bf16.msra.mxu0 %v596
    %887 = vmatprep.subr.bf16.mxu0 %v589
    %888 = vmatpush1.bf16.msra.mxu0 %v588
    %889 = vmatprep.subr.bf16.mxu0 %v581
    %890 = vmatpush1.bf16.msra.mxu0 %v580
    %891 = vmatprep.subr.bf16.mxu0 %v701
    %892 = vmatpush2.bf16.msra.mxu0 %v700
    %893 = vmatprep.subr.bf16.mxu0 %v693
    %894 = vmatpush2.bf16.msra.mxu0 %v692
    %895 = vmatprep.subr.bf16.mxu0 %v685
    %896 = vmatpush2.bf16.msra.mxu0 %v684
    %897 = vmatprep.subr.bf16.mxu0 %v677
    %898 = vmatpush2.bf16.msra.mxu0 %v676
    %899 = vmatprep.subr.bf16.mxu0 %v669
    %900 = vmatpush2.bf16.msra.mxu0 %v668
    %901 = vmatprep.subr.bf16.mxu0 %v661
    %902 = vmatpush2.bf16.msra.mxu0 %v660
    %903 = vmatprep.subr.bf16.mxu0 %v653
    %904 = vmatpush2.bf16.msra.mxu0 %v652
    %905 = vmatprep.subr.bf16.mxu0 %v645
    %906 = vmatpush2.bf16.msra.mxu0 %v644
    %907 = vmatprep.mubr.bf16.mxu0 %v63
    %908 = vmatmul.mubr.bf16.gmra.mxu0 %v62
    %v909 = vpop.f32.mrf.mxu0
    %v910 = vadd.f32 0.0, %v909
    %v911 = vpop.f32.mrf.mxu0
    %v912 = vadd.f32 0.0, %v911
    %v913 = vpop.f32.mrf.mxu0
    %v914 = vpop.f32.mrf.mxu0
    %915 = vdwg.mxu0
    %916 = vmatprep.subr.bf16.mxu0 %v639
    %917 = vmatpush1.bf16.msra.mxu0 %v638
    %918 = vmatprep.subr.bf16.mxu0 %v631
    %919 = vmatpush1.bf16.msra.mxu0 %v630
    %920 = vmatprep.subr.bf16.mxu0 %v623
    %921 = vmatpush1.bf16.msra.mxu0 %v622
    %922 = vmatprep.subr.bf16.mxu0 %v615
    %923 = vmatpush1.bf16.msra.mxu0 %v614
    %924 = vmatprep.subr.bf16.mxu0 %v607
    %925 = vmatpush1.bf16.msra.mxu0 %v606
    %926 = vmatprep.subr.bf16.mxu0 %v599
    %927 = vmatpush1.bf16.msra.mxu0 %v598
    %928 = vmatprep.subr.bf16.mxu0 %v591
    %929 = vmatpush1.bf16.msra.mxu0 %v590
    %930 = vmatprep.subr.bf16.mxu0 %v583
    %931 = vmatpush1.bf16.msra.mxu0 %v582
    %932 = vmatprep.subr.bf16.mxu0 %v703
    %933 = vmatpush2.bf16.msra.mxu0 %v702
    %934 = vmatprep.subr.bf16.mxu0 %v695
    %935 = vmatpush2.bf16.msra.mxu0 %v694
    %936 = vmatprep.subr.bf16.mxu0 %v687
    %937 = vmatpush2.bf16.msra.mxu0 %v686
    %938 = vmatprep.subr.bf16.mxu0 %v679
    %939 = vmatpush2.bf16.msra.mxu0 %v678
    %940 = vmatprep.subr.bf16.mxu0 %v671
    %941 = vmatpush2.bf16.msra.mxu0 %v670
    %942 = vmatprep.subr.bf16.mxu0 %v663
    %943 = vmatpush2.bf16.msra.mxu0 %v662
    %944 = vmatprep.subr.bf16.mxu0 %v655
    %945 = vmatpush2.bf16.msra.mxu0 %v654
    %946 = vmatprep.subr.bf16.mxu0 %v647
    %947 = vmatpush2.bf16.msra.mxu0 %v646
    %948 = vmatprep.mubr.bf16.mxu0 %v63
    %949 = vmatmul.mubr.bf16.gmra.mxu0 %v62
    %v950 = vpop.f32.mrf.mxu0
    %v951 = vadd.f32 0.0, %v950
    %v952 = vpop.f32.mrf.mxu0
    %v953 = vadd.f32 0.0, %v952
    %v954 = vpop.f32.mrf.mxu0
    %v955 = vpop.f32.mrf.mxu0
    %956 = vdwg.mxu0
    %957 = vmatprep.subr.bf16.mxu0 %v641
    %958 = vmatpush1.bf16.msra.mxu0 %v640
    %959 = vmatprep.subr.bf16.mxu0 %v633
    %960 = vmatpush1.bf16.msra.mxu0 %v632
    %961 = vmatprep.subr.bf16.mxu0 %v625
    %962 = vmatpush1.bf16.msra.mxu0 %v624
    %963 = vmatprep.subr.bf16.mxu0 %v617
    %964 = vmatpush1.bf16.msra.mxu0 %v616
    %965 = vmatprep.subr.bf16.mxu0 %v609
    %966 = vmatpush1.bf16.msra.mxu0 %v608
    %967 = vmatprep.subr.bf16.mxu0 %v601
    %968 = vmatpush1.bf16.msra.mxu0 %v600
    %969 = vmatprep.subr.bf16.mxu0 %v593
    %970 = vmatpush1.bf16.msra.mxu0 %v592
    %971 = vmatprep.subr.bf16.mxu0 %v585
    %972 = vmatpush1.bf16.msra.mxu0 %v584
    %973 = vmatprep.subr.bf16.mxu0 %v705
    %974 = vmatpush2.bf16.msra.mxu0 %v704
    %975 = vmatprep.subr.bf16.mxu0 %v697
    %976 = vmatpush2.bf16.msra.mxu0 %v696
    %977 = vmatprep.subr.bf16.mxu0 %v689
    %978 = vmatpush2.bf16.msra.mxu0 %v688
    %979 = vmatprep.subr.bf16.mxu0 %v681
    %980 = vmatpush2.bf16.msra.mxu0 %v680
    %981 = vmatprep.subr.bf16.mxu0 %v673
    %982 = vmatpush2.bf16.msra.mxu0 %v672
    %983 = vmatprep.subr.bf16.mxu0 %v665
    %984 = vmatpush2.bf16.msra.mxu0 %v664
    %985 = vmatprep.subr.bf16.mxu0 %v657
    %986 = vmatpush2.bf16.msra.mxu0 %v656
    %987 = vmatprep.subr.bf16.mxu0 %v649
    %988 = vmatpush2.bf16.msra.mxu0 %v648
    %989 = vmatprep.mubr.bf16.mxu0 %v63
    %990 = vmatmul.mubr.bf16.gmra.mxu0 %v62
    %v991 = vpop.f32.mrf.mxu0
    %v992 = vadd.f32 0.0, %v991
    %v993 = vpop.f32.mrf.mxu0
    %v994 = vadd.f32 0.0, %v993
    %v995 = vpop.f32.mrf.mxu0
    %v996 = vpop.f32.mrf.mxu0
    %997 = vdwg.mxu0
    %v1006 = vcombine.low %v869, %v871
    %v1007 = vcombine.low %v910, %v912
    %v1009 = vunpack.c.l.s4 1983009808
    %v1010 = vunpack.c.0.s8 %v1009
    %v1011 = vlaneseq
    %v1012 = vshrl.u32 %v1011, 7
    %v1013 = vsub.s32 %v1010, %v1012
    %v1014 = vrot.slane %v1006, %v1013
    %v1016 = vunpack.c.l.s4 1983009808
    %v1017 = vunpack.c.0.s8 %v1016
    %v1018 = vlaneseq
    %v1019 = vshrl.u32 %v1018, 7
    %v1020 = vsub.s32 %v1017, %v1019
    %v1021 = vrot.slane %v1007, %v1020
    %v1022 = vcombine.low %v1014, %v1021
    %v1023 = vcombine.low %v951, %v953
    %v1024 = vcombine.low %v992, %v994
    %v1026 = vunpack.c.l.s4 1983009808
    %v1027 = vunpack.c.0.s8 %v1026
    %v1028 = vlaneseq
    %v1029 = vshrl.u32 %v1028, 7
    %v1030 = vsub.s32 %v1027, %v1029
    %v1031 = vrot.slane %v1023, %v1030
    %v1033 = vunpack.c.l.s4 1983009808
    %v1034 = vunpack.c.0.s8 %v1033
    %v1035 = vlaneseq
    %v1036 = vshrl.u32 %v1035, 7
    %v1037 = vsub.s32 %v1034, %v1036
    %v1038 = vrot.slane %v1024, %v1037
    %v1039 = vcombine.low %v1031, %v1038
    %v1042 = vadd.f32 %v64, %v1022
    %v1043 = vadd.f32 %v65, %v1039
    %1044 = vst [vmem:[#allocation2] sm:$0xff] %v1042
    %1045 = vst [vmem:[#allocation2 + $0x8] sm:$0xff] %v1043
    // Predicated region
    $region34: #{net_forward.1} parent=1 // pred_check
      %p1046 = pneg %p42
    $region35: #{net_forward.1} parent=1 // pred_check_branch
      %1048 = sbr.rel (%p1046) target = $region37
    $region36: #{net_forward.1} parent=1 // pred_region
      %v1049 = vld [vmem:[#allocation2] sm:$0xff]
      %v1050 = vld [vmem:[#allocation2 + $0x8] sm:$0xff]
      %v1051 = vld [vmem:[%s2] sm:$0xff]
      %v1053 = vlaneseq
      %v1054 = vshrl.u32 %v1053, 7
      %v1055 = vsub.s32 0, %v1054
      %v1056 = vrot.slane %v1051, %v1055
      %v1057 = vlaneseq
      %v1058 = vshrl.u32 %v1057, 7
      %v1059 = vsub.s32 1, %v1058
      %v1060 = vrot.slane %v1051, %v1059
      %v1061 = vlaneseq
      %v1062 = vshrl.u32 %v1061, 7
      %v1063 = vsub.s32 2, %v1062
      %v1064 = vrot.slane %v1051, %v1063
      %v1065 = vlaneseq
      %v1066 = vshrl.u32 %v1065, 7
      %v1067 = vsub.s32 3, %v1066
      %v1068 = vrot.slane %v1051, %v1067
      %v1069 = vlaneseq
      %v1070 = vshrl.u32 %v1069, 7
      %v1071 = vsub.s32 4, %v1070
      %v1072 = vrot.slane %v1051, %v1071
      %v1073 = vlaneseq
      %v1074 = vshrl.u32 %v1073, 7
      %v1075 = vsub.s32 5, %v1074
      %v1076 = vrot.slane %v1051, %v1075
      %v1077 = vlaneseq
      %v1078 = vshrl.u32 %v1077, 7
      %v1079 = vsub.s32 6, %v1078
      %v1080 = vrot.slane %v1051, %v1079
      %v1081 = vlaneseq
      %v1082 = vshrl.u32 %v1081, 7
      %v1083 = vsub.s32 7, %v1082
      %v1084 = vrot.slane %v1051, %v1083
      %v1085 = vcombine.low %v1056, %v1060
      %v1086 = vcombine.low %v1064, %v1068
      %v1088 = vunpack.c.l.s4 1983009808
      %v1089 = vunpack.c.0.s8 %v1088
      %v1090 = vlaneseq
      %v1091 = vshrl.u32 %v1090, 7
      %v1092 = vsub.s32 %v1089, %v1091
      %v1093 = vrot.slane %v1085, %v1092
      %v1095 = vunpack.c.l.s4 1983009808
      %v1096 = vunpack.c.0.s8 %v1095
      %v1097 = vlaneseq
      %v1098 = vshrl.u32 %v1097, 7
      %v1099 = vsub.s32 %v1096, %v1098
      %v1100 = vrot.slane %v1086, %v1099
      %v1101 = vcombine.low %v1093, %v1100
      %v1102 = vcombine.low %v1072, %v1076
      %v1103 = vcombine.low %v1080, %v1084
      %v1105 = vunpack.c.l.s4 1983009808
      %v1106 = vunpack.c.0.s8 %v1105
      %v1107 = vlaneseq
      %v1108 = vshrl.u32 %v1107, 7
      %v1109 = vsub.s32 %v1106, %v1108
      %v1110 = vrot.slane %v1102, %v1109
      %v1112 = vunpack.c.l.s4 1983009808
      %v1113 = vunpack.c.0.s8 %v1112
      %v1114 = vlaneseq
      %v1115 = vshrl.u32 %v1114, 7
      %v1116 = vsub.s32 %v1113, %v1115
      %v1117 = vrot.slane %v1103, %v1116
      %v1118 = vcombine.low %v1110, %v1117
      %v1121 = vadd.f32 %v1049, %v1101
      %v1122 = vadd.f32 %v1050, %v1118
      %v1123 = vld [vmem:[%s3] sm:$0xff]
      %v1125 = vlaneseq
      %v1126 = vshrl.u32 %v1125, 7
      %v1127 = vsub.s32 0, %v1126
      %v1128 = vrot.slane %v1123, %v1127
      %v1129 = vlaneseq
      %v1130 = vshrl.u32 %v1129, 7
      %v1131 = vsub.s32 1, %v1130
      %v1132 = vrot.slane %v1123, %v1131
      %v1133 = vlaneseq
      %v1134 = vshrl.u32 %v1133, 7
      %v1135 = vsub.s32 2, %v1134
      %v1136 = vrot.slane %v1123, %v1135
      %v1137 = vlaneseq
      %v1138 = vshrl.u32 %v1137, 7
      %v1139 = vsub.s32 3, %v1138
      %v1140 = vrot.slane %v1123, %v1139
      %v1141 = vlaneseq
      %v1142 = vshrl.u32 %v1141, 7
      %v1143 = vsub.s32 4, %v1142
      %v1144 = vrot.slane %v1123, %v1143
      %v1145 = vlaneseq
      %v1146 = vshrl.u32 %v1145, 7
      %v1147 = vsub.s32 5, %v1146
      %v1148 = vrot.slane %v1123, %v1147
      %v1149 = vlaneseq
      %v1150 = vshrl.u32 %v1149, 7
      %v1151 = vsub.s32 6, %v1150
      %v1152 = vrot.slane %v1123, %v1151
      %v1153 = vlaneseq
      %v1154 = vshrl.u32 %v1153, 7
      %v1155 = vsub.s32 7, %v1154
      %v1156 = vrot.slane %v1123, %v1155
      %v1157 = vcombine.low %v1128, %v1132
      %v1158 = vcombine.low %v1136, %v1140
      %v1160 = vunpack.c.l.s4 1983009808
      %v1161 = vunpack.c.0.s8 %v1160
      %v1162 = vlaneseq
      %v1163 = vshrl.u32 %v1162, 7
      %v1164 = vsub.s32 %v1161, %v1163
      %v1165 = vrot.slane %v1157, %v1164
      %v1167 = vunpack.c.l.s4 1983009808
      %v1168 = vunpack.c.0.s8 %v1167
      %v1169 = vlaneseq
      %v1170 = vshrl.u32 %v1169, 7
      %v1171 = vsub.s32 %v1168, %v1170
      %v1172 = vrot.slane %v1158, %v1171
      %v1173 = vcombine.low %v1165, %v1172
      %v1174 = vcombine.low %v1144, %v1148
      %v1175 = vcombine.low %v1152, %v1156
      %v1177 = vunpack.c.l.s4 1983009808
      %v1178 = vunpack.c.0.s8 %v1177
      %v1179 = vlaneseq
      %v1180 = vshrl.u32 %v1179, 7
      %v1181 = vsub.s32 %v1178, %v1180
      %v1182 = vrot.slane %v1174, %v1181
      %v1184 = vunpack.c.l.s4 1983009808
      %v1185 = vunpack.c.0.s8 %v1184
      %v1186 = vlaneseq
      %v1187 = vshrl.u32 %v1186, 7
      %v1188 = vsub.s32 %v1185, %v1187
      %v1189 = vrot.slane %v1175, %v1188
      %v1190 = vcombine.low %v1182, %v1189
      %v1193 = vmul.f32 %v1121, %v1173
      %v1194 = vmul.f32 %v1122, %v1190
      %v1197 = vcombine.high %v1193, %v1193
      %v1199 = vunpack.c.l.s4 1983009808
      %v1200 = vunpack.c.0.s8 %v1199
      %v1201 = vlaneseq
      %v1202 = vshrl.u32 %v1201, 7
      %v1203 = vsub.s32 %v1200, %v1202
      %v1204 = vrot.slane %v1193, %v1203
      %v1206 = vunpack.c.l.s4 1983009808
      %v1207 = vunpack.c.0.s8 %v1206
      %v1208 = vlaneseq
      %v1209 = vshrl.u32 %v1208, 7
      %v1210 = vsub.s32 %v1207, %v1209
      %v1211 = vrot.slane %v1197, %v1210
      %v1212 = vcombine.high %v1204, %v1204
      %v1213 = vcombine.high %v1211, %v1211
      %v1214 = vcombine.high %v1194, %v1194
      %v1216 = vunpack.c.l.s4 1983009808
      %v1217 = vunpack.c.0.s8 %v1216
      %v1218 = vlaneseq
      %v1219 = vshrl.u32 %v1218, 7
      %v1220 = vsub.s32 %v1217, %v1219
      %v1221 = vrot.slane %v1194, %v1220
      %v1223 = vunpack.c.l.s4 1983009808
      %v1224 = vunpack.c.0.s8 %v1223
      %v1225 = vlaneseq
      %v1226 = vshrl.u32 %v1225, 7
      %v1227 = vsub.s32 %v1224, %v1226
      %v1228 = vrot.slane %v1214, %v1227
      %v1229 = vcombine.high %v1221, %v1221
      %v1230 = vcombine.high %v1228, %v1228
      %vm1239 = vcmask 1041408
      %v1240 = vsel %vm1239, %v1204, 0.0
      %v1241 = vsel %vm1239, %v1212, 0.0
      %v1242 = vadd.f32 %v1240, %v1241
      %v1243 = vsel %vm1239, %v1211, 0.0
      %v1244 = vadd.f32 %v1242, %v1243
      %v1245 = vsel %vm1239, %v1213, 0.0
      %v1246 = vadd.f32 %v1244, %v1245
      %v1247 = vsel %vm1239, %v1221, 0.0
      %v1248 = vadd.f32 %v1246, %v1247
      %v1249 = vsel %vm1239, %v1229, 0.0
      %v1250 = vadd.f32 %v1248, %v1249
      %v1251 = vsel %vm1239, %v1228, 0.0
      %v1252 = vadd.f32 %v1250, %v1251
      %v1253 = vsel %vm1239, %v1230, 0.0
      %v1254 = vadd.f32 %v1252, %v1253
      %1255 = vadd.xlane.f32.xlu0 %v1254
      %v1256 = vpop.xlane.xlu0 %1255
      %v1257 = vld [vmem:[#allocation3] sm:$0x1]
      %s1258 = vtos %v1257
      %v1259 = vstv %s1258
      %v1260 = vadd.f32 %v1256, %v1259
      %v1261 = vld [vmem:[%s5] sm:$0x3]
      %v1262 = vmax.f32 %v1260, 0.0
      %v1263 = vmul.f32 %v1260, %v1261
      %v1264 = vsub.f32 %v1262, %v1263
      %v1265 = vand.u32 2147483647, %v1260
      %v1266 = vsub.f32 0.0, %v1265
      %v1267 = vmul.f32 %v1266, 1.442695
      %v1268 = vpow.pop %v1267
      %v1269 = vadd.f32 %v1268, 1.0
      %v1270 = vlog2.pop %v1269
      %v1271 = vmul.f32 %v1270, 0.6931472
      %v1272 = vmul.f32 -0.5, %v1268
      %v1273 = vadd.f32 %v1272, 1.0
      %v1274 = vmul.f32 %v1273, %v1268
      %v1275 = vand.u32 2147483647, %v1268
      %vm1276 = vcmp.lt.f32.partialorder %v1275, 0.0004427343
      %v1277 = vsel %vm1276, %v1274, %v1271
      %v1278 = vadd.f32 %v1264, %v1277
      %vm1279 = vcmask 1024
      %v1280 = vsel %vm1279, %v1278, 0.0
      %1281 = vadd.xlane.f32.xlu0 %v1280
      %v1282 = vpop.xlane.xlu0 %1281
      %v1283 = vrot.slane %v1282, 4
      %v1284 = vadd.f32 %v1282, %v1283
      %v1285 = vrot.slane %v1284, 2
      %v1286 = vadd.f32 %v1284, %v1285
      %v1287 = vrot.slane %v1286, 1
      %v1288 = vadd.f32 %v1286, %v1287
      %s1289 = vtos %v1288
      %v1290 = vstv %s1289
      %v1291 = vrcp.pop 2.0
      %v1292 = vmul.f32 %v1290, %v1291
      %vm1293 = vcmask 0
      %1294 = vst.msk [vmem:[#allocation7] sm:$0x1] %vm1293, %v1292
      %v1295 = vxor.u32 %v1260, 2147483648
      %v1296 = vmul.f32 %v1295, 1.442695
      %v1297 = vpow.pop %v1296
      %v1298 = vadd.f32 %v1297, 1.0
      %v1299 = vrcp.pop %v1298
      %v1300 = vmul.f32 1.0, %v1299
      %vm1301 = vcmp.ne.f32.partialorder %v1300, %v1300
      %v1302 = vsel %vm1301, 0.0, %v1300
      %vm1303 = vcmp.eq.f32.partialorder %v1302, inf
      %v1304 = vsel %vm1303, 3.4028235e+38, %v1302
      %vm1305 = vcmp.eq.f32.partialorder %v1304, -inf
      %v1306 = vsel %vm1305, -3.4028235e+38, %v1304
      %1307 = vst.msk [vmem:[%s6] sm:$0x3] %vm1279, %v1306
    $region37: #{net_forward.1} parent=1 // pred_fallthru
      _
    // Predicated region
    $region38: #{net_forward.1} parent=1 // pred_check
      _
    $region39: #{net_forward.1} parent=1 // pred_check_branch
      %1309 = sbr.rel (0) target = $region41
    $region40: #{net_forward.1} parent=1 // pred_region
      _
    $region41: #{net_forward.1} parent=1 // pred_fallthru
      _
    // Predicated region
    $region42: #{net_forward.1} parent=1 // pred_check
      _
    $region43: #{net_forward.1} parent=1 // pred_check_branch
      %1311 = sbr.rel (0) target = $region45
    $region44: #{net_forward.1} parent=1 // pred_region
      %s1313 = ssub.s32 16, 16
      %1314 = vsyncadd [#allocation6], %s1313
      %s1316 = sshll.u32 [#allocation7], 4
      %s1317 = int_to_ptr.vmem [resolvable:$true] %s1316
      %1319 = dma.vmem_to_hbm [thread:$0]  %s1317, 16, %s7, [#allocation6]
    $region45: #{net_forward.1} parent=1 // pred_fallthru
      _
    // Predicated region
    $region46: #{net_forward.1} parent=1 // pred_check
      _
    $region47: #{net_forward.1} parent=1 // pred_check_branch
      %1321 = sbr.rel (0) target = $region49
    $region48: #{net_forward.1} parent=1 // pred_region
      _
    $region49: #{net_forward.1} parent=1 // pred_fallthru
      _
    // Predicated region
    $region50: #{net_forward.1} parent=1 // pred_check
      _
    $region51: #{net_forward.1} parent=1 // pred_check_branch
      %1323 = sbr.rel (0) target = $region53
    $region52: #{net_forward.1} parent=1 // pred_region
      %1324 = dma.done [#allocation6], 16
    $region53: #{net_forward.1} parent=1 // pred_fallthru
      _
    %1325 = vsyncpa [#allocation5], 1
    %1326 = vsyncpa [#allocation6], 1

</llo_original>
